<compile_context>
chip_gen: v5e
topology: v5e:2x2
jax: 0.10.0
libtpu: 0.0.40
codegen_flags: <defaults>
</compile_context>

<pallas_src>
import jax
import jax.numpy as jnp
from jax.experimental import pallas as pl
from jax.experimental.pallas import tpu as pltpu


def _round_up(a, b):
    return (a + b - 1) // b * b


def _pad2(a, rows, cols):
    pr, pc = rows - a.shape[0], cols - a.shape[1]
    if pr == 0 and pc == 0:
        return a
    return jnp.pad(a, ((0, pr), (0, pc)))


def binary_diff_kernel(coeff_ref, x_ref, base_ref, sign_ref, o_ref, acc_ref):
    # coeff_ref: (1,) f32 scalar-prefetch (SMEM)
    # x_ref:    (tm, tk) activation tile
    # base_ref: (tk, tn) base-weight tile (f32)
    # sign_ref: (tk, tn) {-1,+1} tile stored as int8
    # o_ref:    (tm, tn) output tile
    # acc_ref:  (tm, tn) f32 accumulator scratch (resident across K)
    k = pl.program_id(2)

    @pl.when(k == 0)
    def _():
        acc_ref[...] = jnp.zeros_like(acc_ref)

    coeff = coeff_ref[0]
    # Fused weight tile on the VPU (free filler in an MXU/memory-bound kernel).
    w = base_ref[...] + coeff * sign_ref[...].astype(base_ref.dtype)
    acc_ref[...] += jnp.dot(x_ref[...], w, preferred_element_type=jnp.float32)

    @pl.when(k == pl.num_programs(2) - 1)
    def _():
        o_ref[...] = acc_ref[...].astype(o_ref.dtype)


def binary_diff_forward(x, base, sign_i8, coeff, *, tm=256, tn=256, tk=512):
    """out[b,s,:] = x[b,s,:] @ base + coeff * (x[b,s,:] @ sign)."""
    B, S, K = x.shape
    K2, N = base.shape
    assert K == K2 and sign_i8.shape == (K, N)

    # Collapse batch into the matmul M axis.
    M = B * S
    x2 = x.reshape(M, K)

    # Pad dims so block shapes satisfy the (8, 128) rule; clamp tiles to the
    # padded dims so tiny problems don't over-pad.
    Mp = _round_up(M, 8)
    tm = min(tm, Mp)
    Mp = _round_up(Mp, tm)
    Kp = _round_up(K, 128)
    tk = min(tk, Kp)
    Kp = _round_up(Kp, tk)
    Np = _round_up(N, 128)   # lane-dense output tiles
    tn = min(tn, Np)
    Np = _round_up(Np, tn)

    x_p = _pad2(x2, Mp, Kp)
    base_p = _pad2(base, Kp, Np)
    sign_p = _pad2(sign_i8.astype(jnp.int8), Kp, Np)
    coeff_arr = jnp.reshape(coeff.astype(jnp.float32), (1,))

    grid = (Mp // tm, Np // tn, Kp // tk)

    out_p = pl.pallas_call(
        binary_diff_kernel,
        out_shape=jax.ShapeDtypeStruct((Mp, Np), x.dtype),
        grid_spec=pltpu.PrefetchScalarGridSpec(
            num_scalar_prefetch=1,           # coeff lives in SMEM
            grid=grid,
            in_specs=[
                pl.BlockSpec((tm, tk), lambda i, j, k, c: (i, k)),
                pl.BlockSpec((tk, tn), lambda i, j, k, c: (k, j)),
                pl.BlockSpec((tk, tn), lambda i, j, k, c: (k, j)),
            ],
            out_specs=pl.BlockSpec((tm, tn), lambda i, j, k, c: (i, j)),
            scratch_shapes=[pltpu.VMEM((tm, tn), jnp.float32)],
        ),
        compiler_params=pltpu.CompilerParams(
            dimension_semantics=("parallel", "parallel", "arbitrary"),
            vmem_limit_bytes=32 * 1024 * 1024,
        ),
    )(coeff_arr, x_p, base_p, sign_p)

    return out_p[:M, :N].reshape(B, S, N)


def _make_case(key, B, S, K, N):
    k1, k2, k3 = jax.random.split(key, 3)
    # PyTorch Linear convention: weight is (out_features, in_features).
    diff = jax.random.normal(k1, (N, K), jnp.float32)     # weight passed to __init__
    base_w = jax.random.normal(k2, (N, K), jnp.float32)   # self.base = base_w.T
    x = jax.random.normal(k3, (B, S, K), jnp.float32)
    # __init__: coeff = diff.abs().mean(); mask = 1 where diff >= 0 else 0.
    coeff = jnp.mean(jnp.abs(diff))
    sign_i8 = jnp.where(diff < 0, -1, 1).astype(jnp.int8).T   # (K, N) {-1,+1}
    base = base_w.T                                            # (K, N)
    return x, base, sign_i8, coeff


if __name__ == "__main__":
    key = jax.random.PRNGKey(0)
    k0, k1 = jax.random.split(key)

    ok = True
    # Case 1: small shapes matching the module's toy setting.
    # Case 2: multi-tile grid (exercises M/N/K tiling + K accumulation).
    for kk, B, S, K, N in [(k0, 2, 8, 32, 32), (k1, 1, 256, 1024, 384)]:
        x, base, sign_i8, coeff = _make_case(kk, B, S, K, N)
        out = jax.block_until_ready(binary_diff_forward(x, base, sign_i8, coeff))

        sign_f = sign_i8.astype(jnp.float32)
        ref = (
            jnp.einsum("bsk,kn->bsn", x, base, precision=jax.lax.Precision.HIGHEST)
            + coeff
            * jnp.einsum("bsk,kn->bsn", x, sign_f, precision=jax.lax.Precision.HIGHEST)
        )
        ok &= out.shape == (B, S, N)
        rel_err = jnp.max(jnp.abs(out - ref)) / (jnp.max(jnp.abs(ref)) + 1e-6)
        ok &= bool(rel_err < 1e-2)

    if ok:
        print("KERNEL_OK")
</pallas_src>

<mosaic_0001>
module attributes {stable_mosaic.version = 11 : i64} {
  func.func @binary_diff_kernel(%arg0: i32, %arg1: i32, %arg2: i32, %arg3: memref<1xf32, #tpu.memory_space<smem>>, %arg4: memref<16x128xf32, #tpu.memory_space<vmem>>, %arg5: memref<128x128xf32, #tpu.memory_space<vmem>>, %arg6: memref<128x128xi8, #tpu.memory_space<vmem>>, %arg7: memref<16x128xf32, #tpu.memory_space<vmem>>, %arg8: memref<16x128xf32, #tpu.memory_space<vmem>>) attributes {dimension_semantics = [#tpu.dimension_semantics<parallel>, #tpu.dimension_semantics<parallel>, #tpu.dimension_semantics<arbitrary>], iteration_bounds = array<i64: 1, 1, 1>, scalar_prefetch = 1 : i64, scratch_operands = 1 : i64, tpu.core_type = #tpu.core_type<tc>, window_params = [{transform_indices = @transform_0, window_bounds = array<i64: 16, 128>}, {transform_indices = @transform_1, window_bounds = array<i64: 128, 128>}, {transform_indices = @transform_2, window_bounds = array<i64: 128, 128>}, {transform_indices = @transform_3, window_bounds = array<i64: 16, 128>}]} {
    %c0_i32 = arith.constant 0 : i32
    %0 = arith.cmpi eq, %arg2, %c0_i32 : i32
    %1 = arith.extui %0 : i1 to i32
    %c0_i32_0 = arith.constant 0 : i32
    %2 = arith.cmpi ne, %1, %c0_i32_0 : i32
    scf.if %2 {
      %cst_13 = arith.constant 0.000000e+00 : f32
      %18 = vector.broadcast %cst_13 : f32 to vector<16x128xf32>
      %c0_14 = arith.constant 0 : index
      %c0_15 = arith.constant 0 : index
      %19 = vector.load %arg8[%c0_14, %c0_15] : memref<16x128xf32, #tpu.memory_space<vmem>>, vector<16x128xf32>
      tpu.vector_store %arg8[%c0_14, %c0_15], %18 {strides = array<i32>} : memref<16x128xf32, #tpu.memory_space<vmem>>, vector<16x128xf32>,
    } else {
    }
    %c0 = arith.constant 0 : index
    %3 = memref.load %arg3[%c0] : memref<1xf32, #tpu.memory_space<smem>>
    %c0_1 = arith.constant 0 : index
    %c0_2 = arith.constant 0 : index
    %4 = vector.load %arg5[%c0_1, %c0_2] : memref<128x128xf32, #tpu.memory_space<vmem>>, vector<128x128xf32>
    %c0_3 = arith.constant 0 : index
    %c0_4 = arith.constant 0 : index
    %5 = vector.load %arg6[%c0_3, %c0_4] : memref<128x128xi8, #tpu.memory_space<vmem>>, vector<128x128xi8>
    %6 = arith.sitofp %5 : vector<128x128xi8> to vector<128x128xf32>
    %7 = vector.broadcast %3 : f32 to vector<128x128xf32>
    %8 = arith.mulf %7, %6 : vector<128x128xf32>
    %9 = arith.addf %4, %8 : vector<128x128xf32>
    %c0_5 = arith.constant 0 : index
    %c0_6 = arith.constant 0 : index
    %10 = vector.load %arg8[%c0_5, %c0_6] : memref<16x128xf32, #tpu.memory_space<vmem>>, vector<16x128xf32>
    %c0_7 = arith.constant 0 : index
    %c0_8 = arith.constant 0 : index
    %11 = vector.load %arg4[%c0_7, %c0_8] : memref<16x128xf32, #tpu.memory_space<vmem>>, vector<16x128xf32>
    %cst = arith.constant dense<0.000000e+00> : vector<16x128xf32>
    %12 = tpu.matmul %11, %9, %cst {dimension_numbers = #tpu.dot_dimension_numbers<[1], [0], [0], [1], [0, 0, 1, 1], [], []>} : vector<16x128xf32>, vector<128x128xf32>, vector<16x128xf32> -> vector<16x128xf32>
    %13 = arith.addf %10, %12 : vector<16x128xf32>
    %c0_9 = arith.constant 0 : index
    %c0_10 = arith.constant 0 : index
    %14 = vector.load %arg8[%c0_9, %c0_10] : memref<16x128xf32, #tpu.memory_space<vmem>>, vector<16x128xf32>
    tpu.vector_store %arg8[%c0_9, %c0_10], %13 {strides = array<i32>} : memref<16x128xf32, #tpu.memory_space<vmem>>, vector<16x128xf32>,
    %c0_i32_11 = arith.constant 0 : i32
    %15 = arith.cmpi eq, %arg2, %c0_i32_11 : i32
    %16 = arith.extui %15 : i1 to i32
    %c0_i32_12 = arith.constant 0 : i32
    %17 = arith.cmpi ne, %16, %c0_i32_12 : i32
    scf.if %17 {
      %c0_13 = arith.constant 0 : index
      %c0_14 = arith.constant 0 : index
      %18 = vector.load %arg8[%c0_13, %c0_14] : memref<16x128xf32, #tpu.memory_space<vmem>>, vector<16x128xf32>
      %c0_15 = arith.constant 0 : index
      %c0_16 = arith.constant 0 : index
      %19 = vector.load %arg7[%c0_15, %c0_16] : memref<16x128xf32, #tpu.memory_space<vmem>>, vector<16x128xf32>
      tpu.vector_store %arg7[%c0_15, %c0_16], %18 {strides = array<i32>} : memref<16x128xf32, #tpu.memory_space<vmem>>, vector<16x128xf32>,
    } else {
    }
    return
  }
  func.func @transform_0(%arg0: i32, %arg1: i32, %arg2: i32, %arg3: memref<1xf32, #tpu.memory_space<smem>>) -> (i32, i32) {
    %c0_i32 = arith.constant 0 : i32
    return %arg0, %arg2 : i32, i32
  }
  func.func @transform_1(%arg0: i32, %arg1: i32, %arg2: i32, %arg3: memref<1xf32, #tpu.memory_space<smem>>) -> (i32, i32) {
    %c0_i32 = arith.constant 0 : i32
    return %arg2, %arg1 : i32, i32
  }
  func.func @transform_2(%arg0: i32, %arg1: i32, %arg2: i32, %arg3: memref<1xf32, #tpu.memory_space<smem>>) -> (i32, i32) {
    %c0_i32 = arith.constant 0 : i32
    return %arg2, %arg1 : i32, i32
  }
  func.func @transform_3(%arg0: i32, %arg1: i32, %arg2: i32, %arg3: memref<1xf32, #tpu.memory_space<smem>>) -> (i32, i32) {
    %c0_i32 = arith.constant 0 : i32
    return %arg0, %arg1 : i32, i32
  }
}

</mosaic_0001>

<llo_original>
// kernel: tpu_custom_call.1
$region0: #{tpu_custom_call.1}
  #allocation0 [shape = 'u32[]', space=smem, size = 0x4, offset = 0x4, fixed_abs, tag = 'smem constant byte address 0x4 - core index']
  #allocation1 [shape = 'u32[72,128]{1,0:T(1,128)}', space=vmem, size = 0x9000, scoped, tag = 'internal scratch']
  #allocation2 [shape = 'f32[16,128]{1,0:T(8,128)}', space=vmem, size = 0x2000, scoped, tag = 'scratch operand']
  #allocation3 [shape = 's32[1]{0}', space=sflag, size = 0x4, scoped, tag = 'scoped memory for tpu_custom_call.1']
  #allocation4 [shape = 'f32[1]{0:T(128)S(6)}', space=smem, size = 0x200, scoped, tag = 'prefetched SMEM operand 0']
  %s0 = inlined_call_operand.<no memory space> [shape: f32[1], index: 0, kind: input, shape index: {}]
  %s1 = inlined_call_operand.hbm [shape: f32[16,128], index: 1, kind: input, shape index: {}]
  %s2 = inlined_call_operand.hbm [shape: f32[128,128], index: 2, kind: input, shape index: {}]
  %s3 = inlined_call_operand.hbm [shape: s8[128,128], index: 3, kind: input, shape index: {}]
  %s4 = inlined_call_operand.hbm [shape: f32[16,128], index: 4, kind: output, shape index: {}]
  %s5 = sld [smem:[#allocation0]]
  $region42: #{tpu_custom_call.1} parent=0
    _
  %s7 = ssub.s32 1, %s5
  %s8 = scalar_select 0, %s7, %s5
  %9 = sst [smem:[#allocation4]] %s0
  $region1: #{tpu_custom_call.1} parent=0
    #allocation5 [shape = 'u8[8192]{0}', space=vmem, size = 0x2000, scoped, tag = 'input window, operand 1, single buffered']
    #allocation6 [shape = 's32[1]{0}', space=sflag, size = 0x4, scoped, tag = 'scoped memory for tpu_custom_call.1']
    #allocation7 [shape = 's32[1]{0}', space=sflag, size = 0x4, scoped, tag = 'scoped memory for tpu_custom_call.1']
    #allocation8 [shape = 'u8[65536]{0}', space=vmem, size = 0x10000, scoped, tag = 'input window, operand 2, single buffered']
    #allocation9 [shape = 's32[1]{0}', space=sflag, size = 0x4, scoped, tag = 'scoped memory for tpu_custom_call.1']
    #allocation10 [shape = 'u8[16384]{0}', space=vmem, size = 0x4000, scoped, tag = 'input window, operand 3, single buffered']
    #allocation11 [shape = 'u8[8192]{0}', space=vmem, size = 0x2000, scoped, tag = 'output window, operand 0, single buffered']
    %10 = vsyncpa [#allocation6], 0
    %11 = vsyncpa [#allocation9], 0
    %12 = vsyncpa [#allocation7], 0
    // Predicated region
    $region2: #{tpu_custom_call.1} parent=1 // pred_check
      _
    $region3: #{tpu_custom_call.1} parent=1 // pred_check_branch
      %14 = sbr.rel (0) target = $region5
    $region4: #{tpu_custom_call.1} parent=1 // pred_region
      %16 = vsyncadd [#allocation6], 0
      %s17 = sshll.u32 %s1, 4
      %s18 = int_to_ptr.hbm [resolvable:$true] %s17
      %s19 = sshll.u32 [#allocation5], 4
      %s20 = int_to_ptr.vmem [resolvable:$true] %s19
      %25 = dma.hbm_to_vmem [thread:$0]  %s18, 256, %s20, [#allocation6], 128, 128, 8
    $region5: #{tpu_custom_call.1} parent=1 // pred_fallthru
      _
    // Predicated region
    $region6: #{tpu_custom_call.1} parent=1 // pred_check
      _
    $region7: #{tpu_custom_call.1} parent=1 // pred_check_branch
      %27 = sbr.rel (0) target = $region9
    $region8: #{tpu_custom_call.1} parent=1 // pred_region
      %29 = vsyncadd [#allocation9], 0
      %s30 = sshll.u32 %s2, 4
      %s31 = int_to_ptr.hbm [resolvable:$true] %s30
      %s32 = sshll.u32 [#allocation8], 4
      %s33 = int_to_ptr.vmem [resolvable:$true] %s32
      %38 = dma.hbm_to_vmem [thread:$0]  %s31, 2048, %s33, [#allocation9], 128, 128, 8
    $region9: #{tpu_custom_call.1} parent=1 // pred_fallthru
      _
    // Predicated region
    $region10: #{tpu_custom_call.1} parent=1 // pred_check
      _
    $region11: #{tpu_custom_call.1} parent=1 // pred_check_branch
      %40 = sbr.rel (0) target = $region13
    $region12: #{tpu_custom_call.1} parent=1 // pred_region
      %42 = vsyncadd [#allocation9], 0
      %s43 = sshll.u32 %s3, 4
      %s44 = int_to_ptr.hbm [resolvable:$true] %s43
      %s45 = sshll.u32 [#allocation10], 4
      %s46 = int_to_ptr.vmem [resolvable:$true] %s45
      %51 = dma.hbm_to_vmem [thread:$0]  %s44, 512, %s46, [#allocation9], 128, 128, 8
    $region13: #{tpu_custom_call.1} parent=1 // pred_fallthru
      _
    // Predicated region
    $region14: #{tpu_custom_call.1} parent=1 // pred_check
      _
    $region15: #{tpu_custom_call.1} parent=1 // pred_check_branch
      %53 = sbr.rel (0) target = $region17
    $region16: #{tpu_custom_call.1} parent=1 // pred_region
      %55 = dma.done [#allocation6], 256
    $region17: #{tpu_custom_call.1} parent=1 // pred_fallthru
      _
    // Predicated region
    $region18: #{tpu_custom_call.1} parent=1 // pred_check
      _
    $region19: #{tpu_custom_call.1} parent=1 // pred_check_branch
      %57 = sbr.rel (0) target = $region21
    $region20: #{tpu_custom_call.1} parent=1 // pred_region
      %59 = dma.done [#allocation9], 2048
    $region21: #{tpu_custom_call.1} parent=1 // pred_fallthru
      _
    // Predicated region
    $region22: #{tpu_custom_call.1} parent=1 // pred_check
      _
    $region23: #{tpu_custom_call.1} parent=1 // pred_check_branch
      %61 = sbr.rel (0) target = $region25
    $region24: #{tpu_custom_call.1} parent=1 // pred_region
      %63 = dma.done [#allocation9], 512
    $region25: #{tpu_custom_call.1} parent=1 // pred_fallthru
      _
    %p64 = scmp.eq.s32.totalorder 0, 0
    // Predicated region
    $region26: #{tpu_custom_call.1} parent=1 // pred_check
      %p65 = pneg %p64
    $region27: #{tpu_custom_call.1} parent=1 // pred_check_branch
      %67 = sbr.rel (%p65) target = $region29
    $region28: #{tpu_custom_call.1} parent=1 // pred_region
      %68 = vst [vmem:[#allocation2] sm:$0xff] 0.0
      %69 = vst [vmem:[#allocation2 + $0x8] sm:$0xff] 0.0
    $region29: #{tpu_custom_call.1} parent=1 // pred_fallthru
      _
    %s70 = sld [smem:[#allocation4]]
    %v71 = vld [vmem:[#allocation8] sm:$0xff]
    %v72 = vld [vmem:[#allocation8 + $0x8] sm:$0xff]
    %v73 = vld [vmem:[#allocation8 + $0x10] sm:$0xff]
    %v74 = vld [vmem:[#allocation8 + $0x18] sm:$0xff]
    %v75 = vld [vmem:[#allocation8 + $0x20] sm:$0xff]
    %v76 = vld [vmem:[#allocation8 + $0x28] sm:$0xff]
    %v77 = vld [vmem:[#allocation8 + $0x30] sm:$0xff]
    %v78 = vld [vmem:[#allocation8 + $0x38] sm:$0xff]
    %v79 = vld [vmem:[#allocation8 + $0x40] sm:$0xff]
    %v80 = vld [vmem:[#allocation8 + $0x48] sm:$0xff]
    %v81 = vld [vmem:[#allocation8 + $0x50] sm:$0xff]
    %v82 = vld [vmem:[#allocation8 + $0x58] sm:$0xff]
    %v83 = vld [vmem:[#allocation8 + $0x60] sm:$0xff]
    %v84 = vld [vmem:[#allocation8 + $0x68] sm:$0xff]
    %v85 = vld [vmem:[#allocation8 + $0x70] sm:$0xff]
    %v86 = vld [vmem:[#allocation8 + $0x78] sm:$0xff]
    %v87 = vld [vmem:[#allocation10] sm:$0xff]
    %v88 = vld [vmem:[#allocation10 + $0x8] sm:$0xff]
    %v89 = vld [vmem:[#allocation10 + $0x10] sm:$0xff]
    %v90 = vld [vmem:[#allocation10 + $0x18] sm:$0xff]
    %v91 = vunpack.c.0.s8 %v87
    %v92 = vunpack.c.1.s8 %v87
    %v93 = vunpack.c.2.s8 %v87
    %v94 = vunpack.c.3.s8 %v87
    %v95 = vunpack.c.0.s8 %v88
    %v96 = vunpack.c.1.s8 %v88
    %v97 = vunpack.c.2.s8 %v88
    %v98 = vunpack.c.3.s8 %v88
    %v99 = vunpack.c.0.s8 %v89
    %v100 = vunpack.c.1.s8 %v89
    %v101 = vunpack.c.2.s8 %v89
    %v102 = vunpack.c.3.s8 %v89
    %v103 = vunpack.c.0.s8 %v90
    %v104 = vunpack.c.1.s8 %v90
    %v105 = vunpack.c.2.s8 %v90
    %v106 = vunpack.c.3.s8 %v90
    %v107 = vcvt.s32.f32 %v91
    %v108 = vcvt.s32.f32 %v92
    %v109 = vcvt.s32.f32 %v93
    %v110 = vcvt.s32.f32 %v94
    %v111 = vcvt.s32.f32 %v95
    %v112 = vcvt.s32.f32 %v96
    %v113 = vcvt.s32.f32 %v97
    %v114 = vcvt.s32.f32 %v98
    %v115 = vcvt.s32.f32 %v99
    %v116 = vcvt.s32.f32 %v100
    %v117 = vcvt.s32.f32 %v101
    %v118 = vcvt.s32.f32 %v102
    %v119 = vcvt.s32.f32 %v103
    %v120 = vcvt.s32.f32 %v104
    %v121 = vcvt.s32.f32 %v105
    %v122 = vcvt.s32.f32 %v106
    %v123 = vstv %s70
    %v124 = vmul.f32 %v123, %v107
    %v125 = vmul.f32 %v123, %v108
    %v126 = vmul.f32 %v123, %v109
    %v127 = vmul.f32 %v123, %v110
    %v128 = vmul.f32 %v123, %v111
    %v129 = vmul.f32 %v123, %v112
    %v130 = vmul.f32 %v123, %v113
    %v131 = vmul.f32 %v123, %v114
    %v132 = vmul.f32 %v123, %v115
    %v133 = vmul.f32 %v123, %v116
    %v134 = vmul.f32 %v123, %v117
    %v135 = vmul.f32 %v123, %v118
    %v136 = vmul.f32 %v123, %v119
    %v137 = vmul.f32 %v123, %v120
    %v138 = vmul.f32 %v123, %v121
    %v139 = vmul.f32 %v123, %v122
    %v140 = vadd.f32 %v71, %v124
    %v141 = vadd.f32 %v72, %v125
    %v142 = vadd.f32 %v73, %v126
    %v143 = vadd.f32 %v74, %v127
    %v144 = vadd.f32 %v75, %v128
    %v145 = vadd.f32 %v76, %v129
    %v146 = vadd.f32 %v77, %v130
    %v147 = vadd.f32 %v78, %v131
    %v148 = vadd.f32 %v79, %v132
    %v149 = vadd.f32 %v80, %v133
    %v150 = vadd.f32 %v81, %v134
    %v151 = vadd.f32 %v82, %v135
    %v152 = vadd.f32 %v83, %v136
    %v153 = vadd.f32 %v84, %v137
    %v154 = vadd.f32 %v85, %v138
    %v155 = vadd.f32 %v86, %v139
    %v156 = vld [vmem:[#allocation2] sm:$0xff]
    %v157 = vld [vmem:[#allocation2 + $0x8] sm:$0xff]
    %v158 = vld [vmem:[#allocation5] sm:$0xff]
    %v159 = vld [vmem:[#allocation5 + $0x8] sm:$0xff]
    %160 = vmatpush.msra.mxu0 %v155
    %161 = vmatpush.msra.mxu0 %v154
    %162 = vmatpush.msra.mxu0 %v153
    %163 = vmatpush.msra.mxu0 %v152
    %164 = vmatpush.msra.mxu0 %v151
    %165 = vmatpush.msra.mxu0 %v150
    %166 = vmatpush.msra.mxu0 %v149
    %167 = vmatpush.msra.mxu0 %v148
    %168 = vmatpush.msra.mxu0 %v147
    %169 = vmatpush.msra.mxu0 %v146
    %170 = vmatpush.msra.mxu0 %v145
    %171 = vmatpush.msra.mxu0 %v144
    %172 = vmatpush.msra.mxu0 %v143
    %173 = vmatpush.msra.mxu0 %v142
    %174 = vmatpush.msra.mxu0 %v141
    %175 = vmatpush.msra.mxu0 %v140
    %176 = vmatmul.f32.gmra.mxu0 %v158
    %v177 = vpop.f32.mrf.mxu0
    %v178 = vadd.f32 0.0, %v177
    %179 = vmatmul.f32.gmra.mxu0 %v159
    %v180 = vpop.f32.mrf.mxu0
    %v181 = vadd.f32 0.0, %v180
    %182 = vdwg.mxu0
    %v183 = vadd.f32 %v156, %v178
    %v184 = vadd.f32 %v157, %v181
    %185 = vst [vmem:[#allocation2] sm:$0xff] %v183
    %186 = vst [vmem:[#allocation2 + $0x8] sm:$0xff] %v184
    // Predicated region
    $region30: #{tpu_custom_call.1} parent=1 // pred_check
      %p187 = pneg %p64
    $region31: #{tpu_custom_call.1} parent=1 // pred_check_branch
      %189 = sbr.rel (%p187) target = $region33
    $region32: #{tpu_custom_call.1} parent=1 // pred_region
      %v190 = vld [vmem:[#allocation2] sm:$0xff]
      %v191 = vld [vmem:[#allocation2 + $0x8] sm:$0xff]
      %192 = vst [vmem:[#allocation11] sm:$0xff] %v190
      %193 = vst [vmem:[#allocation11 + $0x8] sm:$0xff] %v191
    $region33: #{tpu_custom_call.1} parent=1 // pred_fallthru
      _
    // Predicated region
    $region34: #{tpu_custom_call.1} parent=1 // pred_check
      _
    $region35: #{tpu_custom_call.1} parent=1 // pred_check_branch
      %195 = sbr.rel (0) target = $region37
    $region36: #{tpu_custom_call.1} parent=1 // pred_region
      %197 = vsyncadd [#allocation7], 0
      %s198 = sshll.u32 [#allocation11], 4
      %s199 = int_to_ptr.vmem [resolvable:$true] %s198
      %s200 = sshll.u32 %s4, 4
      %s201 = int_to_ptr.hbm [resolvable:$true] %s200
      %206 = dma.vmem_to_hbm [thread:$0]  %s199, 256, %s201, [#allocation7], 128, 128, 8
    $region37: #{tpu_custom_call.1} parent=1 // pred_fallthru
      _
    // Predicated region
    $region38: #{tpu_custom_call.1} parent=1 // pred_check
      _
    $region39: #{tpu_custom_call.1} parent=1 // pred_check_branch
      %208 = sbr.rel (0) target = $region41
    $region40: #{tpu_custom_call.1} parent=1 // pred_region
      %210 = dma.done [#allocation7], 256
    $region41: #{tpu_custom_call.1} parent=1 // pred_fallthru
      _
    %211 = vsyncpa [#allocation6], 1
    %212 = vsyncpa [#allocation9], 1
    %213 = vsyncpa [#allocation7], 1

</llo_original>
